<compile_context>
chip_gen: v7x
topology: tpu7x:2x2x1
jax: 0.10.0
libtpu: 0.0.40
codegen_flags: <defaults>
</compile_context>

<pallas_src>
import functools

import jax
import jax.numpy as jnp
from jax.experimental import pallas as pl
from jax.experimental.pallas import tpu as pltpu


def _cdiv(a, b):
    return (a + b - 1) // b


def _round_up(a, m):
    return _cdiv(a, m) * m


def _grid_regular_kernel(x_ref, out_ref, *, W, HW, B):
    """One grid step: B flattened planes -> accumulate (8, HW) partial sums."""
    i = pl.program_id(1)

    @pl.when(i == 0)
    def _init():
        out_ref[...] = jnp.zeros_like(out_ref)

    xv = x_ref[...]                                   # (B, HW)
    if xv.dtype != jnp.float32:                       # cast only if sub-32-bit
        xv = xv.astype(jnp.float32)

    # Horizontal neighbours are adjacent lanes; mask out positions that would
    # pair the last column of one image row with the first of the next row.
    d = xv[:, 1:] - xv[:, :-1]                        # (B, HW-1)
    lane = jax.lax.broadcasted_iota(jnp.int32, (1, HW - 1), 1)
    dx2 = jnp.where(lane % W != W - 1, d * d, 0.0)    # (B, HW-1)

    # Vertical neighbours are exactly W lanes apart and never cross a plane
    # boundary within a row, so no mask is needed.
    dv = xv[:, W:] - xv[:, :-W]                       # (B, HW-W)
    dy2 = dv * dv

    # Fold the B rows down to 8 sublanes with pure VPU vreg adds (the reshape
    # only splits the sublane axis, so it is layout-preserving).
    g = B // 8
    pdx = jnp.sum(dx2.reshape(g, 8, HW - 1), axis=0)  # (8, HW-1)
    pdy = jnp.sum(dy2.reshape(g, 8, HW - W), axis=0)  # (8, HW-W)

    out_ref[0, 0, :, : HW - 1] += pdx
    out_ref[0, 1, :, : HW - W] += pdy


def grid_regular(x, grad_lambda=1.0, num_parallel=2):
    """x: (N, C, H, W) float array. Returns scalar float32 loss."""
    N, C, H, W = x.shape
    if H < 2 or W < 2:
        raise ValueError("grid_regular requires H >= 2 and W >= 2")
    NC = N * C
    HW = H * W
    P = max(1, int(num_parallel))

    # Rows (planes) per grid step: multiple of 8, ~1 MiB per pipeline buffer,
    # shrunk for small inputs.  Double-buffered blocks stay far below VMEM
    # limits on all of v5e/v6e/v7x.
    itemsize = jnp.dtype(x.dtype).itemsize
    B = (1 << 20) // max(1, HW * itemsize)
    B = max(8, min(1024, (B // 8) * 8))
    rows_per_chunk = _round_up(max(1, _cdiv(NC, P)), 8)
    B = min(B, rows_per_chunk)
    S = _cdiv(rows_per_chunk, B)        # sequential reduction steps per chunk
    rows_total = P * S * B

    # Lane-dense layout: one flattened plane per row.  Zero-padded rows add
    # exactly zero to both sums, so the static divisors below remain exact.
    xf = x.reshape(NC, HW)
    if rows_total != NC:
        xf = jnp.pad(xf, ((0, rows_total - NC), (0, 0)))

    kernel = functools.partial(_grid_regular_kernel, W=W, HW=HW, B=B)

    partials = pl.pallas_call(
        kernel,
        out_shape=jax.ShapeDtypeStruct((P, 2, 8, HW), jnp.float32),
        grid_spec=pltpu.PrefetchScalarGridSpec(
            num_scalar_prefetch=0,
            grid=(P, S),
            in_specs=[pl.BlockSpec((B, HW), lambda p, i: (p * S + i, 0))],
            out_specs=pl.BlockSpec((1, 2, 8, HW), lambda p, i: (p, 0, 0, 0)),
        ),
        compiler_params=pltpu.CompilerParams(
            # chunk axis parallel (v7x dual TensorCore), reduction axis arbitrary
            dimension_semantics=("parallel", "arbitrary"),
            vmem_limit_bytes=32 * 1024 * 1024,
        ),
    )(xf)

    sums = jnp.sum(partials, axis=(0, 2, 3))          # (2,) f32 totals
    n_dx = jnp.float32(NC * H * (W - 1))
    n_dy = jnp.float32(NC * (H - 1) * W)
    loss = sums[0] / n_dx + sums[1] / n_dy
    return jnp.float32(grad_lambda) * loss


def grid_regular_ref(x, grad_lambda=1.0):
    """Pure-JAX reference matching the PyTorch forward exactly."""
    x = x.astype(jnp.float32)
    dx = x[:, :, :, 1:] - x[:, :, :, :-1]
    dy = x[:, :, 1:, :] - x[:, :, :-1, :]
    return grad_lambda * (jnp.mean(dx * dx) + jnp.mean(dy * dy))


if __name__ == "__main__":
    key = jax.random.PRNGKey(0)
    # small NCHW input consistent with the module's conv-style usage
    x = jax.random.normal(key, (2, 4, 16, 16), dtype=jnp.float32)

    out = jax.block_until_ready(grid_regular(x, grad_lambda=1.0))
    ref = grid_regular_ref(x, grad_lambda=1.0)
    assert jnp.allclose(out, ref, rtol=1e-5, atol=1e-5), (out, ref)

    # second case exercising zero-padding (NC=3) and non-power-of-two W
    x2 = jax.random.normal(jax.random.PRNGKey(1), (1, 3, 24, 40), dtype=jnp.float32)
    out2 = jax.block_until_ready(grid_regular(x2, grad_lambda=0.5))
    ref2 = grid_regular_ref(x2, grad_lambda=0.5)
    assert jnp.allclose(out2, ref2, rtol=1e-5, atol=1e-5), (out2, ref2)

    print("KERNEL_OK")
</pallas_src>

<mosaic_0001>
module attributes {stable_mosaic.version = 11 : i64} {
  func.func @_grid_regular_kernel(%arg0: i32, %arg1: i32, %arg2: memref<8x256xf32, #tpu.memory_space<vmem>>, %arg3: memref<1x2x8x256xf32, #tpu.memory_space<vmem>>) attributes {dimension_semantics = [#tpu.dimension_semantics<parallel>, #tpu.dimension_semantics<arbitrary>], iteration_bounds = array<i64: 2, 1>, scalar_prefetch = 0 : i64, scratch_operands = 0 : i64, tpu.core_type = #tpu.core_type<tc>, window_params = [{transform_indices = @transform_0, window_bounds = array<i64: 8, 256>}, {transform_indices = @transform_1, window_bounds = array<i64: 1, 2, 8, 256>}]} {
    %c0_i32 = arith.constant 0 : i32
    %0 = arith.cmpi eq, %arg1, %c0_i32 : i32
    %1 = arith.extui %0 : i1 to i32
    %c0_i32_0 = arith.constant 0 : i32
    %2 = arith.cmpi ne, %1, %c0_i32_0 : i32
    scf.if %2 {
      %cst_23 = arith.constant 0.000000e+00 : f32
      %51 = vector.broadcast %cst_23 : f32 to vector<1x2x8x256xf32>
      %c0_24 = arith.constant 0 : index
      %c0_25 = arith.constant 0 : index
      %c0_26 = arith.constant 0 : index
      %c0_27 = arith.constant 0 : index
      %52 = vector.load %arg3[%c0_24, %c0_25, %c0_26, %c0_27] : memref<1x2x8x256xf32, #tpu.memory_space<vmem>>, vector<1x2x8x256xf32>
      tpu.vector_store %arg3[%c0_24, %c0_25, %c0_26, %c0_27], %51 {strides = array<i32>} : memref<1x2x8x256xf32, #tpu.memory_space<vmem>>, vector<1x2x8x256xf32>,
    } else {
    }
    %c0 = arith.constant 0 : index
    %c0_1 = arith.constant 0 : index
    %3 = vector.load %arg2[%c0, %c0_1] : memref<8x256xf32, #tpu.memory_space<vmem>>, vector<8x256xf32>
    %4 = vector.extract_strided_slice %3 {offsets = [0, 1], sizes = [8, 255], strides = [1, 1]} : vector<8x256xf32> to vector<8x255xf32>
    %5 = vector.extract_strided_slice %3 {offsets = [0, 0], sizes = [8, 255], strides = [1, 1]} : vector<8x256xf32> to vector<8x255xf32>
    %6 = arith.subf %4, %5 : vector<8x255xf32>
    %7 = tpu.iota {dimensions = array<i32: 1>} : vector<1x255xi32>
    %c16_i32 = arith.constant 16 : i32
    %c0_i32_2 = arith.constant 0 : i32
    %8 = arith.cmpi eq, %c16_i32, %c0_i32_2 : i32
    %c1_i32 = arith.constant 1 : i32
    %9 = arith.select %8, %c1_i32, %c16_i32 : i32
    %10 = vector.broadcast %9 : i32 to vector<1x255xi32>
    %11 = arith.remsi %7, %10 : vector<1x255xi32>
    %c0_i32_3 = arith.constant 0 : i32
    %12 = vector.broadcast %c0_i32_3 : i32 to vector<1x255xi32>
    %13 = arith.cmpi ne, %11, %12 : vector<1x255xi32>
    %c0_i32_4 = arith.constant 0 : i32
    %14 = vector.broadcast %c0_i32_4 : i32 to vector<1x255xi32>
    %15 = arith.cmpi slt, %11, %14 : vector<1x255xi32>
    %c0_i32_5 = arith.constant 0 : i32
    %16 = arith.cmpi slt, %9, %c0_i32_5 : i32
    %17 = vector.broadcast %16 : i1 to vector<1x255xi1>
    %18 = vector.broadcast %17 : vector<1x255xi1> to vector<1x255xi1>
    %19 = arith.xori %15, %18 : vector<1x255xi1>
    %20 = arith.andi %19, %13 : vector<1x255xi1>
    %21 = vector.broadcast %9 : i32 to vector<1x255xi32>
    %22 = arith.addi %11, %21 : vector<1x255xi32>
    %23 = arith.select %20, %22, %11 : vector<1x255xi1>, vector<1x255xi32>
    %c15_i32 = arith.constant 15 : i32
    %24 = vector.broadcast %c15_i32 : i32 to vector<1x255xi32>
    %25 = arith.cmpi ne, %23, %24 : vector<1x255xi32>
    %26 = arith.mulf %6, %6 : vector<8x255xf32>
    %cst = arith.constant 0.000000e+00 : f32
    %27 = vector.shape_cast %25 : vector<1x255xi1> to vector<1x255xi1>
    %28 = vector.broadcast %27 : vector<1x255xi1> to vector<8x255xi1>
    %29 = vector.broadcast %cst : f32 to vector<8x255xf32>
    %30 = arith.select %28, %26, %29 : vector<8x255xi1>, vector<8x255xf32>
    %31 = vector.extract_strided_slice %3 {offsets = [0, 16], sizes = [8, 240], strides = [1, 1]} : vector<8x256xf32> to vector<8x240xf32>
    %32 = vector.extract_strided_slice %3 {offsets = [0, 0], sizes = [8, 240], strides = [1, 1]} : vector<8x256xf32> to vector<8x240xf32>
    %33 = arith.subf %31, %32 : vector<8x240xf32>
    %34 = arith.mulf %33, %33 : vector<8x240xf32>
    %35 = vector.shape_cast %30 : vector<8x255xf32> to vector<1x8x255xf32>
    %cst_6 = arith.constant dense<0.000000e+00> : vector<8x255xf32>
    %36 = vector.multi_reduction <add>, %35, %cst_6 [0] : vector<1x8x255xf32> to vector<8x255xf32>
    %37 = vector.shape_cast %34 : vector<8x240xf32> to vector<1x8x240xf32>
    %cst_7 = arith.constant dense<0.000000e+00> : vector<8x240xf32>
    %38 = vector.multi_reduction <add>, %37, %cst_7 [0] : vector<1x8x240xf32> to vector<8x240xf32>
    %c0_8 = arith.constant 0 : index
    %c0_9 = arith.constant 0 : index
    %c0_10 = arith.constant 0 : index
    %c0_11 = arith.constant 0 : index
    %39 = vector.load %arg3[%c0_8, %c0_9, %c0_10, %c0_11] : memref<1x2x8x256xf32, #tpu.memory_space<vmem>>, vector<1x1x8x255xf32>
    %40 = vector.shape_cast %39 : vector<1x1x8x255xf32> to vector<8x255xf32>
    %41 = arith.addf %40, %36 : vector<8x255xf32>
    %c0_12 = arith.constant 0 : index
    %c0_13 = arith.constant 0 : index
    %c0_14 = arith.constant 0 : index
    %c0_15 = arith.constant 0 : index
    %42 = vector.load %arg3[%c0_12, %c0_13, %c0_14, %c0_15] : memref<1x2x8x256xf32, #tpu.memory_space<vmem>>, vector<1x1x8x255xf32>
    %43 = vector.shape_cast %42 : vector<1x1x8x255xf32> to vector<8x255xf32>
    %44 = vector.shape_cast %41 : vector<8x255xf32> to vector<1x1x8x255xf32>
    tpu.vector_store %arg3[%c0_12, %c0_13, %c0_14, %c0_15], %44 {strides = array<i32>} : memref<1x2x8x256xf32, #tpu.memory_space<vmem>>, vector<1x1x8x255xf32>,
    %c0_16 = arith.constant 0 : index
    %c1 = arith.constant 1 : index
    %c0_17 = arith.constant 0 : index
    %c0_18 = arith.constant 0 : index
    %45 = vector.load %arg3[%c0_16, %c1, %c0_17, %c0_18] : memref<1x2x8x256xf32, #tpu.memory_space<vmem>>, vector<1x1x8x240xf32>
    %46 = vector.shape_cast %45 : vector<1x1x8x240xf32> to vector<8x240xf32>
    %47 = arith.addf %46, %38 : vector<8x240xf32>
    %c0_19 = arith.constant 0 : index
    %c1_20 = arith.constant 1 : index
    %c0_21 = arith.constant 0 : index
    %c0_22 = arith.constant 0 : index
    %48 = vector.load %arg3[%c0_19, %c1_20, %c0_21, %c0_22] : memref<1x2x8x256xf32, #tpu.memory_space<vmem>>, vector<1x1x8x240xf32>
    %49 = vector.shape_cast %48 : vector<1x1x8x240xf32> to vector<8x240xf32>
    %50 = vector.shape_cast %47 : vector<8x240xf32> to vector<1x1x8x240xf32>
    tpu.vector_store %arg3[%c0_19, %c1_20, %c0_21, %c0_22], %50 {strides = array<i32>} : memref<1x2x8x256xf32, #tpu.memory_space<vmem>>, vector<1x1x8x240xf32>,
    return
  }
  func.func @transform_0(%arg0: i32, %arg1: i32) -> (i32, i32) {
    %c1_i32 = arith.constant 1 : i32
    %0 = arith.muli %arg0, %c1_i32 : i32
    %1 = arith.addi %0, %arg1 : i32
    %c0_i32 = arith.constant 0 : i32
    %c0_i32_0 = arith.constant 0 : i32
    return %1, %c0_i32 : i32, i32
  }
  func.func @transform_1(%arg0: i32, %arg1: i32) -> (i32, i32, i32, i32) {
    %c0_i32 = arith.constant 0 : i32
    %c0_i32_0 = arith.constant 0 : i32
    %c0_i32_1 = arith.constant 0 : i32
    %c0_i32_2 = arith.constant 0 : i32
    return %arg0, %c0_i32, %c0_i32_0, %c0_i32_1 : i32, i32, i32, i32
  }
}

</mosaic_0001>

<llo_original>
// kernel: tpu_custom_call.1
$region0: #{tpu_custom_call.1}
  #allocation0 [shape = 'u32[]', space=smem, size = 0x4, offset = 0x4, fixed_abs, tag = 'smem constant byte address 0x4 - core index']
  #allocation1 [shape = 'u32[144,128]{1,0:T(1,128)}', space=vmem, size = 0x12000, scoped, tag = 'internal scratch']
  %s0 = inlined_call_operand.hbm [shape: f32[16,256], index: 0, kind: input, shape index: {}]
  %s1 = inlined_call_operand.hbm [shape: f32[2,2,8,256], index: 1, kind: output, shape index: {}]
  %s2 = sld [smem:[#allocation0]]
  $region45: #{tpu_custom_call.1} parent=0
    _
  %s4 = ssub.s32 1, %s2
  %s5 = scalar_select 0, %s4, %s2
  $region1: #{tpu_custom_call.1} parent=0
    #allocation2 [shape = 'u8[16384]{0}', space=vmem, size = 0x4000, scoped, tag = 'input window, operand 0']
    #allocation3 [shape = 's32[2]{0}', space=sflag, size = 0x8, scoped, tag = 'scoped memory for tpu_custom_call.1']
    #allocation4 [shape = 's32[2]{0}', space=sflag, size = 0x8, scoped, tag = 'scoped memory for tpu_custom_call.1']
    #allocation5 [shape = 'u8[32768]{0}', space=vmem, size = 0x8000, scoped, tag = 'output window, operand 0']
    %6 = vsyncpa [#allocation3], 0
    %s7 = scalar_lea.sflag [#allocation3], 1
    %8 = vsyncpa %s7, 0
    %9 = vsyncpa [#allocation4], 0
    %s10 = scalar_lea.sflag [#allocation4], 1
    %11 = vsyncpa %s10, 0
    loop: start=0, step=1, limit=4
    $region2: #{tpu_custom_call.1} parent=1 // loop_pre_header
      _
    $region3: #{tpu_custom_call.1} parent=1 // loop_header
      %s13 = sphi 0, %s17
      %p14 = scmp.ge.s32.totalorder %s13, 4
      %s20 = sphi 0, %s32
      %s21 = sphi 0, %s28
      %s22 = sphi 0, %s20
      %s23 = sphi 0, %s21
      %s24 = sphi 0, %s22
      %s25 = sphi 0, %s23
      %s37 = sphi 0, %s39
      %s40 = sphi 0, %s37
      %s41 = sphi 0, %s40
      %s57 = sphi 0, %s41
      %s63 = sphi 0, %s65
      %s66 = sphi 0, %s63
      %s67 = sphi 0, %s66
      %s83 = sphi 0, %s67
    $region4: #{tpu_custom_call.1} parent=1 // loop_header_branch
      %16 = sbr.rel (%p14) target = $region8
    $region5: #{tpu_custom_call.1} parent=1 // loop_body
      %s18 = ssub.s32 %s13, 1
      %s19 = ssub.s32 %s13, 2
      %s26 = sadd.s32 1, %s21
      %p27 = scmp.ge.s32.totalorder %s26, 1
      %s28 = scalar_select %p27, 0, %s26
      %s29 = sadd.s32 1, %s20
      %s30 = scalar_select %p27, %s29, %s20
      %p31 = scmp.ge.s32.totalorder %s30, 2
      %s32 = scalar_select %p31, 0, %s30
      %s33 = sadd.s32 %s20, %s21
      %s34 = sadd.s32 %s32, %s28
      %s35 = ssub.s32 %s33, %s34
      %p36 = scmp.eq.s32.totalorder %s35, 0
      %s38 = sadd.s32 %s37, 1
      %s39 = scalar_select %p36, %s37, %s38
      %p42 = pneg %p36
      %p43 = scmp.eq.s32.totalorder %s13, 1
      %p44 = por %p42, %p43
      %p45 = scmp.ne.s32.totalorder %s37, %s40
      %p46 = scmp.eq.s32.totalorder %s13, 0
      %p47 = por %p45, %p46
      %p48 = scmp.ne.s32.totalorder %s37, %s40
      %p49 = scmp.eq.s32.totalorder %s18, 1
      %p50 = por %p48, %p49
      %p51 = scmp.ne.s32.totalorder %s40, %s41
      %p52 = scmp.eq.s32.totalorder %s18, 0
      %p53 = por %p51, %p52
      %p54 = scmp.ne.s32.totalorder %s40, %s41
      %p55 = scmp.eq.s32.totalorder %s19, 1
      %p56 = por %p54, %p55
      %p58 = scmp.ne.s32.totalorder %s41, %s57
      %p59 = scmp.eq.s32.totalorder %s19, 0
      %p60 = por %p58, %p59
      %s61 = ssub.s32 %s20, %s32
      %p62 = scmp.eq.s32.totalorder %s61, 0
      %s64 = sadd.s32 %s63, 1
      %s65 = scalar_select %p62, %s63, %s64
      %p68 = pneg %p62
      %p69 = scmp.eq.s32.totalorder %s13, 1
      %p70 = por %p68, %p69
      %p71 = scmp.ne.s32.totalorder %s63, %s66
      %p72 = scmp.eq.s32.totalorder %s13, 0
      %p73 = por %p71, %p72
      %p74 = scmp.ne.s32.totalorder %s63, %s66
      %p75 = scmp.eq.s32.totalorder %s18, 1
      %p76 = por %p74, %p75
      %p77 = scmp.ne.s32.totalorder %s66, %s67
      %p78 = scmp.eq.s32.totalorder %s18, 0
      %p79 = por %p77, %p78
      %p80 = scmp.ne.s32.totalorder %s66, %s67
      %p81 = scmp.eq.s32.totalorder %s19, 1
      %p82 = por %p80, %p81
      %p84 = scmp.ne.s32.totalorder %s67, %s83
      %p85 = scmp.eq.s32.totalorder %s19, 0
      %p86 = por %p84, %p85
      %p87 = scmp.le.s32.totalorder 1, %s13
      %p88 = scmp.lt.s32.totalorder %s13, 3
      %p89 = pnand %p87, %p88
      %p90 = pneg %p89
      // Predicated region
      $region9: #{tpu_custom_call.1} parent=5 // pred_check
        _
      $region10: #{tpu_custom_call.1} parent=5 // pred_check_branch
        %92 = sbr.rel (%p89) target = $region12
      $region11: #{tpu_custom_call.1} parent=5 // pred_region
        %s93 = ssub.s32 %s13, 1
      $region12: #{tpu_custom_call.1} parent=5 // pred_fallthru
        _
      %p94 = scmp.lt.s32.totalorder %s13, 2
      // Predicated region
      $region13: #{tpu_custom_call.1} parent=5 // pred_check
        %p95 = pneg %p94
      $region14: #{tpu_custom_call.1} parent=5 // pred_check_branch
        %97 = sbr.rel (%p95) target = $region16
      $region15: #{tpu_custom_call.1} parent=5 // pred_region
        // Predicated region
        $region17: #{tpu_custom_call.1} parent=15 // pred_check
          %p98 = pneg %p47
        $region18: #{tpu_custom_call.1} parent=15 // pred_check_branch
          %100 = sbr.rel (%p98) target = $region20
        $region19: #{tpu_custom_call.1} parent=15 // pred_region
          %s101 = sand.u32 %s37, 1
          %s102 = scalar_lea.sflag [#allocation3], %s101
          %s103 = sand.u32 %s37, 1
          %s104 = smul.addr %s103, 16
          %s105 = scalar_lea.vmem [#allocation2], %s104
          %s106 = sadd.s32 %s20, %s21
          %s108 = ssub.s32 256, 256
          %109 = vsyncadd %s102, %s108
          %s110 = smul.addr %s106, 2
          %s111 = smul.addr %s110, 128
          %s112 = scalar_lea.hbm %s0, %s111
          %s114 = sshll.u32 %s105, 4
          %s115 = int_to_ptr.vmem [resolvable:$true] %s114
          %117 = dma.hbm_to_vmem [thread:$0]  %s112, 256, %s115, %s102
        $region20: #{tpu_custom_call.1} parent=15 // pred_fallthru
          _
      $region16: #{tpu_custom_call.1} parent=5 // pred_fallthru
        _
      %p118 = scmp.le.s32.totalorder 1, %s13
      %p119 = scmp.lt.s32.totalorder %s13, 3
      %p120 = pnand %p118, %p119
      %p121 = pneg %p120
      // Predicated region
      $region21: #{tpu_custom_call.1} parent=5 // pred_check
        _
      $region22: #{tpu_custom_call.1} parent=5 // pred_check_branch
        %123 = sbr.rel (%p120) target = $region24
      $region23: #{tpu_custom_call.1} parent=5 // pred_region
        %s124 = ssub.s32 %s13, 1
        %s125 = sand.u32 %s40, 1
        %s126 = scalar_lea.sflag [#allocation3], %s125
        %s127 = sand.u32 %s40, 1
        %s128 = smul.addr %s127, 16
        %s129 = scalar_lea.vmem [#allocation2], %s128
        // Predicated region
        $region25: #{tpu_custom_call.1} parent=23 // pred_check
          %p130 = pneg %p53
        $region26: #{tpu_custom_call.1} parent=23 // pred_check_branch
          %132 = sbr.rel (%p130) target = $region28
        $region27: #{tpu_custom_call.1} parent=23 // pred_region
          %133 = dma.done %s126, 256
        $region28: #{tpu_custom_call.1} parent=23 // pred_fallthru
          _
        %s134 = sand.u32 %s40, 1
        %s135 = scalar_lea.sflag [#allocation3], %s134
        %s136 = sand.u32 %s40, 1
        %s137 = smul.addr %s136, 16
        %s138 = scalar_lea.vmem [#allocation2], %s137
        %p139 = pneg %p53
        %p140 = pneg %p50
        %p141 = pneg %p79
        %p142 = pneg %p76
        %s143 = sand.u32 %s66, 1
        %s144 = scalar_lea.sflag [#allocation4], %s143
        %s145 = sand.u32 %s66, 1
        %s146 = smul.addr %s145, 32
        %s147 = scalar_lea.vmem [#allocation5], %s146
        %s148 = sadd.s32 %s22, %s23
        %p149 = scmp.eq.s32.totalorder %s23, 0
        // Predicated region
        $region29: #{tpu_custom_call.1} parent=23 // pred_check
          %p150 = pneg %p149
        $region30: #{tpu_custom_call.1} parent=23 // pred_check_branch
          %152 = sbr.rel (%p150) target = $region32
        $region31: #{tpu_custom_call.1} parent=23 // pred_region
          %153 = vst [vmem:[%s147] sm:$0xff] 0.0
          %154 = vst [vmem:[%s147 + $0x8] sm:$0xff] 0.0
          %155 = vst [vmem:[%s147 + $0x10] sm:$0xff] 0.0
          %156 = vst [vmem:[%s147 + $0x18] sm:$0xff] 0.0
        $region32: #{tpu_custom_call.1} parent=23 // pred_fallthru
          _
        %v157 = vld [vmem:[%s129] sm:$0xff]
        %v158 = vld [vmem:[%s129 + $0x8] sm:$0xff]
        %161 = vrot.lane.b32.xlu0 %v157, 1
        %v162 = vpop.permute.xlu0 %161
        %163 = vrot.lane.b32.xlu0 %v158, 1
        %v164 = vpop.permute.xlu0 %163
        %vm165 = vcmask 7168
        %v166 = vsel %vm165, %v162, %v164
        %v169 = vsub.f32 %v157, %v162
        %v170 = vsub.f32 %v158, %v166
        %v171 = vlaneseq
        %v172 = vand.u32 %v171, 127
        %v173 = vadd.s32 %v172, 128
        %vm174 = vcmp.lt.s32.totalorder %v172, 0
        %v175 = vsub.s32 0, %v172
        %v176 = vsel %vm174, %v175, %v172
        %v177 = vshrl.u32 %v176, 4
        %v178 = vand.u32 %v176, 15
        %v179 = vsub.s32 0, %v178
        %v180 = vsel %vm174, %v179, %v178
        %vm181 = vcmp.lt.s32.totalorder %v173, 0
        %v182 = vsub.s32 0, %v173
        %v183 = vsel %vm181, %v182, %v173
        %v184 = vshrl.u32 %v183, 4
        %v185 = vand.u32 %v183, 15
        %v186 = vsub.s32 0, %v185
        %v187 = vsel %vm181, %v186, %v185
        %vm188 = vcmp.ne.s32.totalorder %v180, 0
        %vm189 = vcmp.ne.s32.totalorder %v187, 0
        %vm190 = vcmp.lt.s32.totalorder %v180, 0
        %vm191 = vcmp.lt.s32.totalorder %v187, 0
        %vm192 = vmand %vm190, %vm188
        %vm193 = vmand %vm191, %vm189
        %v194 = vadd.s32 %v180, 16
        %v195 = vadd.s32 %v187, 16
        %v196 = vsel %vm192, %v194, %v180
        %v197 = vsel %vm193, %v195, %v187
        %vm198 = vcmp.ne.s32.totalorder %v196, 15
        %vm199 = vcmp.ne.s32.totalorder %v197, 15
        %v200 = vmul.f32 %v169, %v169
        %v201 = vmul.f32 %v170, %v170
        %v202 = vsel %vm198, 1, 0
        %v203 = vsel %vm199, 1, 0
        %vm204 = vcmp.eq.s32.totalorder %v202, 1
        %vm205 = vcmp.eq.s32.totalorder %v203, 1
        %208 = vrot.lane.b32.xlu0 %v200, 127
        %v209 = vpop.permute.xlu0 %208
        %210 = vrot.lane.b32.xlu0 %v201, 127
        %v211 = vpop.permute.xlu0 %210
        %vm212 = vcmask 1039360
        %v213 = vsel %vm212, %v209, %v211
        %v216 = vsel %vm204, %v213, 0.0
        %v217 = vsel %vm205, %v211, 0.0
        %218 = vrot.lane.b32.xlu0 %v157, 16
        %v219 = vpop.permute.xlu0 %218
        %220 = vrot.lane.b32.xlu0 %v158, 16
        %v221 = vpop.permute.xlu0 %220
        %vm222 = vcmask 130048
        %v223 = vsel %vm222, %v219, %v221
        %v226 = vsub.f32 %v157, %v219
        %v227 = vsub.f32 %v158, %v223
        %v228 = vmul.f32 %v226, %v226
        %v229 = vmul.f32 %v227, %v227
        %v230 = vadd.f32 %v216, 0.0
        %v231 = vadd.f32 %v217, 0.0
        %v232 = vadd.f32 %v228, 0.0
        %v233 = vadd.f32 %v229, 0.0
        %v234 = vld [vmem:[%s147] sm:$0xff]
        %v235 = vld [vmem:[%s147 + $0x8] sm:$0xff]
        %v236 = vadd.f32 %v234, %v230
        %v237 = vadd.f32 %v235, %v231
        %238 = vst [vmem:[%s147] sm:$0xff] %v236
        %239 = vst.msk [vmem:[%s147 + $0x8] sm:$0xff] %vm212, %v237
        %s240 = scalar_lea.vmem %s147, 16 [#allocation5]
        %v241 = vld [vmem:[%s240] sm:$0xff]
        %v242 = vld [vmem:[%s240 + $0x8] sm:$0xff]
        %245 = vrot.lane.b32.xlu0 %v232, 112
        %v246 = vpop.permute.xlu0 %245
        %247 = vrot.lane.b32.xlu0 %v233, 112
        %v248 = vpop.permute.xlu0 %247
        %vm249 = vcmask 916480
        %v250 = vsel %vm249, %v246, %v248
        %v253 = vadd.f32 %v241, %v250
        %v254 = vadd.f32 %v242, %v248
        %255 = vst [vmem:[%s240] sm:$0xff] %v253
        %256 = vst.msk [vmem:[%s240 + $0x8] sm:$0xff] %vm249, %v254
        %s257 = sand.u32 %s66, 1
        %s258 = scalar_lea.sflag [#allocation4], %s257
        %s259 = sand.u32 %s66, 1
        %s260 = smul.addr %s259, 32
        %s261 = scalar_lea.vmem [#allocation5], %s260
        // Predicated region
        $region33: #{tpu_custom_call.1} parent=23 // pred_check
          %p262 = pneg %p76
        $region34: #{tpu_custom_call.1} parent=23 // pred_check_branch
          %264 = sbr.rel (%p262) target = $region36
        $region35: #{tpu_custom_call.1} parent=23 // pred_region
          %s266 = ssub.s32 512, 512
          %267 = vsyncadd %s258, %s266
          %s268 = smul.addr %s22, 4
          %s269 = smul.addr %s268, 128
          %s270 = scalar_lea.hbm %s1, %s269
          %s271 = sshll.u32 %s261, 4
          %s272 = int_to_ptr.vmem [resolvable:$true] %s271
          %277 = dma.vmem_to_hbm [thread:$0]  %s272, 512, %s270, %s258, 256, 256, 16
        $region36: #{tpu_custom_call.1} parent=23 // pred_fallthru
          _
      $region24: #{tpu_custom_call.1} parent=5 // pred_fallthru
        _
      %p278 = scmp.le.s32.totalorder 2, %s13
      // Predicated region
      $region37: #{tpu_custom_call.1} parent=5 // pred_check
        %p279 = pneg %p278
      $region38: #{tpu_custom_call.1} parent=5 // pred_check_branch
        %281 = sbr.rel (%p279) target = $region40
      $region39: #{tpu_custom_call.1} parent=5 // pred_region
        %s282 = ssub.s32 %s13, 2
        // Predicated region
        $region41: #{tpu_custom_call.1} parent=39 // pred_check
          %p283 = pneg %p82
        $region42: #{tpu_custom_call.1} parent=39 // pred_check_branch
          %285 = sbr.rel (%p283) target = $region44
        $region43: #{tpu_custom_call.1} parent=39 // pred_region
          %s286 = sand.u32 %s67, 1
          %s287 = scalar_lea.sflag [#allocation4], %s286
          %s288 = sand.u32 %s67, 1
          %s289 = smul.addr %s288, 32
          %s290 = scalar_lea.vmem [#allocation5], %s289
          %291 = dma.done %s287, 512
        $region44: #{tpu_custom_call.1} parent=39 // pred_fallthru
          _
      $region40: #{tpu_custom_call.1} parent=5 // pred_fallthru
        _
    $region6: #{tpu_custom_call.1} parent=1 // loop_footer
      %s17 = sadd.s32 1, %s13
    $region7: #{tpu_custom_call.1} parent=1 // loop_footer_branch
      %12 = sbr.rel target = $region3
    $region8: #{tpu_custom_call.1} parent=1 // loop_exit
      _
    %292 = vsyncpa [#allocation3], 1
    %s293 = scalar_lea.sflag [#allocation3], 1
    %294 = vsyncpa %s293, 1
    %295 = vsyncpa [#allocation4], 1
    %s296 = scalar_lea.sflag [#allocation4], 1
    %297 = vsyncpa %s296, 1

</llo_original>
